<compile_context>
chip_gen: v7x
topology: tpu7x:2x2x1
jax: 0.10.0
libtpu: 0.0.40
codegen_flags: <defaults>
</compile_context>

<pallas_src>
import jax
import jax.numpy as jnp
from jax.experimental import pallas as pl
from jax.experimental.pallas import tpu as pltpu


def _round_up(x, m):
    return (x + m - 1) // m * m


def _mlp_kernel(x_ref, w1_ref, b1_ref, w2_ref, b2_ref, out_ref, acc_ref):
    # grid = (M_tiles, K_tiles); K is the reduction axis of the first matmul.
    # x_ref:  (tm, tk) bf16      w1_ref: (tk, Hp) bf16   b1_ref: (1, Hp) f32
    # w2_ref: (Hp, Ep) bf16      b2_ref: (1, Ep)  f32    out_ref: (tm, Ep) f32
    # acc_ref: (tm, Hp) f32 scratch accumulator (lives across the K axis).
    k = pl.program_id(1)

    @pl.when(k == 0)
    def _():
        acc_ref[...] = jnp.zeros_like(acc_ref)

    # First layer partial product on the MXU, accumulated in f32.
    acc_ref[...] += jnp.dot(x_ref[...], w1_ref[...],
                            preferred_element_type=jnp.float32)

    @pl.when(k == pl.num_programs(1) - 1)
    def _():
        # Bias + ReLU in f32 (native VPU path on all generations).
        h = jnp.maximum(acc_ref[...] + b1_ref[...], 0.0)
        # Second layer: bf16 operands, f32 accumulation.
        y = jnp.dot(h.astype(w2_ref.dtype), w2_ref[...],
                    preferred_element_type=jnp.float32)
        out_ref[...] = (y + b2_ref[...]).astype(out_ref.dtype)


def embedding_net_pallas(x_flat, params, *, compute_dtype=jnp.bfloat16):
    """Apply the embedding MLP to a stacked batch (M, D) in one pallas_call."""
    w1, b1, w2, b2 = params["w1"], params["b1"], params["w2"], params["b2"]
    M, D = x_flat.shape
    H = w1.shape[1]
    E = w2.shape[1]

    # ---- tiled / padded sizes -------------------------------------------
    tm = min(128, _round_up(M, 8))          # sublane-aligned M tile
    M_pad = _round_up(M, tm)
    D_pad = _round_up(D, 128)
    tk = 512 if D_pad % 512 == 0 else (256 if D_pad % 256 == 0 else 128)
    H_pad = _round_up(H, 128)
    E_pad = _round_up(E, 128)               # lane-dense output tile

    # ---- pad + cast operands (done once, outside the kernel) -------------
    xp = jnp.zeros((M_pad, D_pad), compute_dtype).at[:M, :D].set(
        x_flat.astype(compute_dtype))
    w1p = jnp.zeros((D_pad, H_pad), compute_dtype).at[:D, :H].set(
        w1.astype(compute_dtype))
    w2p = jnp.zeros((H_pad, E_pad), compute_dtype).at[:H, :E].set(
        w2.astype(compute_dtype))
    b1p = jnp.zeros((1, H_pad), jnp.float32).at[:, :H].set(
        b1.astype(jnp.float32))
    b2p = jnp.zeros((1, E_pad), jnp.float32).at[:, :E].set(
        b2.astype(jnp.float32))

    grid = (M_pad // tm, D_pad // tk)

    out = pl.pallas_call(
        _mlp_kernel,
        out_shape=jax.ShapeDtypeStruct((M_pad, E_pad), jnp.float32),
        grid_spec=pltpu.PrefetchScalarGridSpec(
            num_scalar_prefetch=0,
            grid=grid,
            in_specs=[
                pl.BlockSpec((tm, tk), lambda m, k: (m, k)),       # x
                pl.BlockSpec((tk, H_pad), lambda m, k: (k, 0)),    # w1 (K-tiled)
                pl.BlockSpec((1, H_pad), lambda m, k: (0, 0)),     # b1
                pl.BlockSpec((H_pad, E_pad), lambda m, k: (0, 0)), # w2
                pl.BlockSpec((1, E_pad), lambda m, k: (0, 0)),     # b2
            ],
            out_specs=pl.BlockSpec((tm, E_pad), lambda m, k: (m, 0)),
            scratch_shapes=[pltpu.VMEM((tm, H_pad), jnp.float32)],
        ),
        compiler_params=pltpu.CompilerParams(
            dimension_semantics=("parallel", "arbitrary"),
            vmem_limit_bytes=64 * 1024 * 1024,
        ),
    )(xp, w1p, b1p, w2p, b2p)

    return out[:M, :E]


def triplet_net_forward(x1, x2, x3, params):
    """TripletNet.forward: shared embedding net applied to each input.

    The three branches are stacked into one (3*B, D) batch so the shared
    weights are fetched into VMEM exactly once.
    """
    B = x1.shape[0]
    xs = jnp.concatenate(
        [x1.reshape(B, -1), x2.reshape(B, -1), x3.reshape(B, -1)], axis=0
    ).astype(jnp.float32)
    out = embedding_net_pallas(xs, params)
    return out[:B], out[B:2 * B], out[2 * B:3 * B]


def get_embedding(x, params):
    """TripletNet.get_embedding equivalent."""
    B = x.shape[0]
    return embedding_net_pallas(x.reshape(B, -1).astype(jnp.float32), params)


def init_params(key, in_dim, hidden_dim, emb_dim):
    k1, k2, k3, k4 = jax.random.split(key, 4)
    s1 = 1.0 / jnp.sqrt(in_dim)
    s2 = 1.0 / jnp.sqrt(hidden_dim)
    return {
        "w1": jax.random.uniform(k1, (in_dim, hidden_dim), jnp.float32, -s1, s1),
        "b1": jax.random.uniform(k2, (1, hidden_dim), jnp.float32, -s1, s1),
        "w2": jax.random.uniform(k3, (hidden_dim, emb_dim), jnp.float32, -s2, s2),
        "b2": jax.random.uniform(k4, (1, emb_dim), jnp.float32, -s2, s2),
    }


if __name__ == "__main__":
    key = jax.random.PRNGKey(0)
    kx1, kx2, kx3, kp = jax.random.split(key, 4)

    # Small shapes consistent with an image-triplet setup: NCHW = (2, 4, 16, 16)
    B, C, Hs, Ws = 2, 4, 16, 16
    D = C * Hs * Ws          # 1024 flattened features
    HIDDEN = 128
    EMB = 128

    x1 = jax.random.normal(kx1, (B, C, Hs, Ws), jnp.float32)
    x2 = jax.random.normal(kx2, (B, C, Hs, Ws), jnp.float32)
    x3 = jax.random.normal(kx3, (B, C, Hs, Ws), jnp.float32)

    params = init_params(kp, D, HIDDEN, EMB)

    out1, out2, out3 = jax.jit(triplet_net_forward)(x1, x2, x3, params)
    jax.block_until_ready((out1, out2, out3))

    # Reference: same bf16-operand / f32-accumulation path in plain JAX.
    w1b = params["w1"].astype(jnp.bfloat16)
    w2b = params["w2"].astype(jnp.bfloat16)

    def ref_embed(x):
        xf = x.reshape(x.shape[0], -1).astype(jnp.bfloat16)
        h = jnp.maximum(
            jnp.dot(xf, w1b, preferred_element_type=jnp.float32) + params["b1"],
            0.0)
        return (jnp.dot(h.astype(jnp.bfloat16), w2b,
                        preferred_element_type=jnp.float32) + params["b2"])

    r1, r2, r3 = ref_embed(x1), ref_embed(x2), ref_embed(x3)
    assert out1.shape == (B, EMB) and out2.shape == (B, EMB) and out3.shape == (B, EMB)
    assert jnp.allclose(out1, r1, atol=5e-3, rtol=5e-3)
    assert jnp.allclose(out2, r2, atol=5e-3, rtol=5e-3)
    assert jnp.allclose(out3, r3, atol=5e-3, rtol=5e-3)

    print("KERNEL_OK")
</pallas_src>

<mosaic_0001>
module attributes {stable_mosaic.version = 11 : i64} {
  func.func @_mlp_kernel(%arg0: i32, %arg1: i32, %arg2: memref<8x512xbf16, #tpu.memory_space<vmem>>, %arg3: memref<512x128xbf16, #tpu.memory_space<vmem>>, %arg4: memref<1x128xf32, #tpu.memory_space<vmem>>, %arg5: memref<128x128xbf16, #tpu.memory_space<vmem>>, %arg6: memref<1x128xf32, #tpu.memory_space<vmem>>, %arg7: memref<8x128xf32, #tpu.memory_space<vmem>>, %arg8: memref<8x128xf32, #tpu.memory_space<vmem>>) attributes {dimension_semantics = [#tpu.dimension_semantics<parallel>, #tpu.dimension_semantics<arbitrary>], iteration_bounds = array<i64: 1, 2>, scalar_prefetch = 0 : i64, scratch_operands = 1 : i64, tpu.core_type = #tpu.core_type<tc>, window_params = [{transform_indices = @transform_0, window_bounds = array<i64: 8, 512>}, {transform_indices = @transform_1, window_bounds = array<i64: 512, 128>}, {pipeline_mode = #tpu.pipeline_mode<synchronous>, transform_indices = @transform_2, window_bounds = array<i64: 1, 128>}, {pipeline_mode = #tpu.pipeline_mode<synchronous>, transform_indices = @transform_3, window_bounds = array<i64: 128, 128>}, {pipeline_mode = #tpu.pipeline_mode<synchronous>, transform_indices = @transform_4, window_bounds = array<i64: 1, 128>}, {transform_indices = @transform_5, window_bounds = array<i64: 8, 128>}]} {
    %c0_i32 = arith.constant 0 : i32
    %0 = arith.cmpi eq, %arg1, %c0_i32 : i32
    %1 = arith.extui %0 : i1 to i32
    %c0_i32_0 = arith.constant 0 : i32
    %2 = arith.cmpi ne, %1, %c0_i32_0 : i32
    scf.if %2 {
      %cst_9 = arith.constant 0.000000e+00 : f32
      %12 = vector.broadcast %cst_9 : f32 to vector<8x128xf32>
      %c0_10 = arith.constant 0 : index
      %c0_11 = arith.constant 0 : index
      %13 = vector.load %arg8[%c0_10, %c0_11] : memref<8x128xf32, #tpu.memory_space<vmem>>, vector<8x128xf32>
      tpu.vector_store %arg8[%c0_10, %c0_11], %12 {strides = array<i32>} : memref<8x128xf32, #tpu.memory_space<vmem>>, vector<8x128xf32>,
    } else {
    }
    %c0 = arith.constant 0 : index
    %c0_1 = arith.constant 0 : index
    %3 = vector.load %arg8[%c0, %c0_1] : memref<8x128xf32, #tpu.memory_space<vmem>>, vector<8x128xf32>
    %c0_2 = arith.constant 0 : index
    %c0_3 = arith.constant 0 : index
    %4 = vector.load %arg2[%c0_2, %c0_3] : memref<8x512xbf16, #tpu.memory_space<vmem>>, vector<8x512xbf16>
    %c0_4 = arith.constant 0 : index
    %c0_5 = arith.constant 0 : index
    %5 = vector.load %arg3[%c0_4, %c0_5] : memref<512x128xbf16, #tpu.memory_space<vmem>>, vector<512x128xbf16>
    %cst = arith.constant dense<0.000000e+00> : vector<8x128xf32>
    %6 = tpu.matmul %4, %5, %cst {dimension_numbers = #tpu.dot_dimension_numbers<[1], [0], [0], [1], [0, 0, 1, 1], [], []>} : vector<8x512xbf16>, vector<512x128xbf16>, vector<8x128xf32> -> vector<8x128xf32>
    %7 = arith.addf %3, %6 : vector<8x128xf32>
    %c0_6 = arith.constant 0 : index
    %c0_7 = arith.constant 0 : index
    %8 = vector.load %arg8[%c0_6, %c0_7] : memref<8x128xf32, #tpu.memory_space<vmem>>, vector<8x128xf32>
    tpu.vector_store %arg8[%c0_6, %c0_7], %7 {strides = array<i32>} : memref<8x128xf32, #tpu.memory_space<vmem>>, vector<8x128xf32>,
    %c1_i32 = arith.constant 1 : i32
    %9 = arith.cmpi eq, %arg1, %c1_i32 : i32
    %10 = arith.extui %9 : i1 to i32
    %c0_i32_8 = arith.constant 0 : i32
    %11 = arith.cmpi ne, %10, %c0_i32_8 : i32
    scf.if %11 {
      %c0_9 = arith.constant 0 : index
      %c0_10 = arith.constant 0 : index
      %12 = vector.load %arg8[%c0_9, %c0_10] : memref<8x128xf32, #tpu.memory_space<vmem>>, vector<8x128xf32>
      %c0_11 = arith.constant 0 : index
      %c0_12 = arith.constant 0 : index
      %13 = vector.load %arg4[%c0_11, %c0_12] : memref<1x128xf32, #tpu.memory_space<vmem>>, vector<1x128xf32>
      %14 = vector.broadcast %13 : vector<1x128xf32> to vector<8x128xf32>
      %15 = arith.addf %12, %14 : vector<8x128xf32>
      %cst_13 = arith.constant 0.000000e+00 : f32
      %16 = vector.broadcast %cst_13 : f32 to vector<8x128xf32>
      %17 = arith.maximumf %15, %16 : vector<8x128xf32>
      %18 = arith.truncf %17 : vector<8x128xf32> to vector<8x128xbf16>
      %c0_14 = arith.constant 0 : index
      %c0_15 = arith.constant 0 : index
      %19 = vector.load %arg5[%c0_14, %c0_15] : memref<128x128xbf16, #tpu.memory_space<vmem>>, vector<128x128xbf16>
      %cst_16 = arith.constant dense<0.000000e+00> : vector<8x128xf32>
      %20 = tpu.matmul %18, %19, %cst_16 {dimension_numbers = #tpu.dot_dimension_numbers<[1], [0], [0], [1], [0, 0, 1, 1], [], []>} : vector<8x128xbf16>, vector<128x128xbf16>, vector<8x128xf32> -> vector<8x128xf32>
      %c0_17 = arith.constant 0 : index
      %c0_18 = arith.constant 0 : index
      %21 = vector.load %arg6[%c0_17, %c0_18] : memref<1x128xf32, #tpu.memory_space<vmem>>, vector<1x128xf32>
      %22 = vector.broadcast %21 : vector<1x128xf32> to vector<8x128xf32>
      %23 = arith.addf %20, %22 : vector<8x128xf32>
      %c0_19 = arith.constant 0 : index
      %c0_20 = arith.constant 0 : index
      %24 = vector.load %arg7[%c0_19, %c0_20] : memref<8x128xf32, #tpu.memory_space<vmem>>, vector<8x128xf32>
      tpu.vector_store %arg7[%c0_19, %c0_20], %23 {strides = array<i32>} : memref<8x128xf32, #tpu.memory_space<vmem>>, vector<8x128xf32>,
    } else {
    }
    return
  }
  func.func @transform_0(%arg0: i32, %arg1: i32) -> (i32, i32) {
    %c0_i32 = arith.constant 0 : i32
    return %arg0, %arg1 : i32, i32
  }
  func.func @transform_1(%arg0: i32, %arg1: i32) -> (i32, i32) {
    %c0_i32 = arith.constant 0 : i32
    %c0_i32_0 = arith.constant 0 : i32
    return %arg1, %c0_i32 : i32, i32
  }
  func.func @transform_2(%arg0: i32, %arg1: i32) -> (i32, i32) {
    %c0_i32 = arith.constant 0 : i32
    %c0_i32_0 = arith.constant 0 : i32
    %c0_i32_1 = arith.constant 0 : i32
    return %c0_i32, %c0_i32_0 : i32, i32
  }
  func.func @transform_3(%arg0: i32, %arg1: i32) -> (i32, i32) {
    %c0_i32 = arith.constant 0 : i32
    %c0_i32_0 = arith.constant 0 : i32
    %c0_i32_1 = arith.constant 0 : i32
    return %c0_i32, %c0_i32_0 : i32, i32
  }
  func.func @transform_4(%arg0: i32, %arg1: i32) -> (i32, i32) {
    %c0_i32 = arith.constant 0 : i32
    %c0_i32_0 = arith.constant 0 : i32
    %c0_i32_1 = arith.constant 0 : i32
    return %c0_i32, %c0_i32_0 : i32, i32
  }
  func.func @transform_5(%arg0: i32, %arg1: i32) -> (i32, i32) {
    %c0_i32 = arith.constant 0 : i32
    %c0_i32_0 = arith.constant 0 : i32
    return %arg0, %c0_i32 : i32, i32
  }
}

</mosaic_0001>

<llo_original>
// kernel: triplet_net_forward.1
$region0: #{triplet_net_forward.1}
  #allocation0 [shape = 'u32[]', space=smem, size = 0x4, offset = 0x4, fixed_abs, tag = 'smem constant byte address 0x4 - core index']
  #allocation1 [shape = 'u32[144,128]{1,0:T(1,128)}', space=vmem, size = 0x12000, scoped, tag = 'internal scratch']
  #allocation2 [shape = 'f32[8,128]{1,0:T(8,128)}', space=vmem, size = 0x1000, scoped, tag = 'scratch operand']
  %s0 = inlined_call_operand.hbm [shape: bf16[8,1024], index: 0, kind: input, shape index: {}]
  %s1 = inlined_call_operand.hbm [shape: bf16[1024,128], index: 1, kind: input, shape index: {}]
  %s2 = inlined_call_operand.hbm [shape: f32[1,128], index: 2, kind: input, shape index: {}]
  %s3 = inlined_call_operand.hbm [shape: bf16[128,128], index: 3, kind: input, shape index: {}]
  %s4 = inlined_call_operand.hbm [shape: f32[1,128], index: 4, kind: input, shape index: {}]
  %s5 = inlined_call_operand.hbm [shape: f32[8,128], index: 5, kind: output, shape index: {}]
  %s6 = sld [smem:[#allocation0]]
  $region81: #{triplet_net_forward.1} parent=0
    _
  %s8 = ssub.s32 1, %s6
  %s9 = scalar_select 0, %s8, %s6
  $region1: #{triplet_net_forward.1} parent=0
    #allocation3 [shape = 'u8[16384]{0}', space=vmem, size = 0x4000, scoped, tag = 'input window, operand 0']
    #allocation4 [shape = 's32[2]{0}', space=sflag, size = 0x8, scoped, tag = 'scoped memory for triplet_net_forward.1']
    #allocation5 [shape = 's32[2]{0}', space=sflag, size = 0x8, scoped, tag = 'scoped memory for triplet_net_forward.1']
    #allocation6 [shape = 'u8[262144]{0}', space=vmem, size = 0x40000, scoped, tag = 'input window, operand 1']
    #allocation7 [shape = 's32[2]{0}', space=sflag, size = 0x8, scoped, tag = 'scoped memory for triplet_net_forward.1']
    #allocation8 [shape = 'u8[512]{0}', space=vmem, size = 0x400, scoped, tag = 'input window, operand 2, single buffered']
    #allocation9 [shape = 'u8[32768]{0}', space=vmem, size = 0x8000, scoped, tag = 'input window, operand 3, single buffered']
    #allocation10 [shape = 's32[1]{0}', space=sflag, size = 0x4, scoped, tag = 'scoped memory for triplet_net_forward.1']
    #allocation11 [shape = 'u8[512]{0}', space=vmem, size = 0x400, scoped, tag = 'input window, operand 4, single buffered']
    #allocation12 [shape = 'u8[4096]{0}', space=vmem, size = 0x1000, scoped, tag = 'output window, operand 0, single buffered']
    %10 = vsyncpa [#allocation4], 0
    %s11 = scalar_lea.sflag [#allocation4], 1
    %12 = vsyncpa %s11, 0
    %13 = vsyncpa [#allocation7], 0
    %s14 = scalar_lea.sflag [#allocation7], 1
    %15 = vsyncpa %s14, 0
    %16 = vsyncpa [#allocation10], 0
    %17 = vsyncpa [#allocation5], 0
    loop: start=0, step=1, limit=4
    $region2: #{triplet_net_forward.1} parent=1 // loop_pre_header
      _
    $region3: #{triplet_net_forward.1} parent=1 // loop_header
      %s19 = sphi 0, %s23
      %p20 = scmp.ge.s32.totalorder %s19, 4
      %s26 = sphi 0, %s38
      %s27 = sphi 0, %s34
      %s28 = sphi 0, %s26
      %s29 = sphi 0, %s27
      %s30 = sphi 0, %s28
      %s31 = sphi 0, %s29
      %s43 = sphi 0, %s45
      %s46 = sphi 0, %s43
      %s47 = sphi 0, %s46
      %s63 = sphi 0, %s47
      %s69 = sphi 0, %s71
      %s72 = sphi 0, %s69
      %s73 = sphi 0, %s72
      %s89 = sphi 0, %s73
      %s93 = sphi 0, %s93
      %s95 = sphi 0, %s93
      %s96 = sphi 0, %s95
      %s110 = sphi 0, %s96
      %s114 = sphi 0, %s114
      %s116 = sphi 0, %s114
      %s117 = sphi 0, %s116
      %s131 = sphi 0, %s117
      %s135 = sphi 0, %s135
      %s137 = sphi 0, %s135
      %s138 = sphi 0, %s137
      %s152 = sphi 0, %s138
      %s158 = sphi 0, %s160
      %s161 = sphi 0, %s158
      %s162 = sphi 0, %s161
      %s178 = sphi 0, %s162
    $region4: #{triplet_net_forward.1} parent=1 // loop_header_branch
      %22 = sbr.rel (%p20) target = $region8
    $region5: #{triplet_net_forward.1} parent=1 // loop_body
      %s24 = ssub.s32 %s19, 1
      %s25 = ssub.s32 %s19, 2
      %s32 = sadd.s32 1, %s27
      %p33 = scmp.ge.s32.totalorder %s32, 2
      %s34 = scalar_select %p33, 0, %s32
      %s35 = sadd.s32 1, %s26
      %s36 = scalar_select %p33, %s35, %s26
      %p37 = scmp.ge.s32.totalorder %s36, 1
      %s38 = scalar_select %p37, 0, %s36
      %s39 = ssub.s32 %s26, %s38
      %s40 = ssub.s32 %s27, %s34
      %s41 = sor.u32 %s39, %s40
      %p42 = scmp.eq.s32.totalorder %s41, 0
      %s44 = sadd.s32 %s43, 1
      %s45 = scalar_select %p42, %s43, %s44
      %p48 = pneg %p42
      %p49 = scmp.eq.s32.totalorder %s19, 1
      %p50 = por %p48, %p49
      %p51 = scmp.ne.s32.totalorder %s43, %s46
      %p52 = scmp.eq.s32.totalorder %s19, 0
      %p53 = por %p51, %p52
      %p54 = scmp.ne.s32.totalorder %s43, %s46
      %p55 = scmp.eq.s32.totalorder %s24, 1
      %p56 = por %p54, %p55
      %p57 = scmp.ne.s32.totalorder %s46, %s47
      %p58 = scmp.eq.s32.totalorder %s24, 0
      %p59 = por %p57, %p58
      %p60 = scmp.ne.s32.totalorder %s46, %s47
      %p61 = scmp.eq.s32.totalorder %s25, 1
      %p62 = por %p60, %p61
      %p64 = scmp.ne.s32.totalorder %s47, %s63
      %p65 = scmp.eq.s32.totalorder %s25, 0
      %p66 = por %p64, %p65
      %s67 = ssub.s32 %s27, %s34
      %p68 = scmp.eq.s32.totalorder %s67, 0
      %s70 = sadd.s32 %s69, 1
      %s71 = scalar_select %p68, %s69, %s70
      %p74 = pneg %p68
      %p75 = scmp.eq.s32.totalorder %s19, 1
      %p76 = por %p74, %p75
      %p77 = scmp.ne.s32.totalorder %s69, %s72
      %p78 = scmp.eq.s32.totalorder %s19, 0
      %p79 = por %p77, %p78
      %p80 = scmp.ne.s32.totalorder %s69, %s72
      %p81 = scmp.eq.s32.totalorder %s24, 1
      %p82 = por %p80, %p81
      %p83 = scmp.ne.s32.totalorder %s72, %s73
      %p84 = scmp.eq.s32.totalorder %s24, 0
      %p85 = por %p83, %p84
      %p86 = scmp.ne.s32.totalorder %s72, %s73
      %p87 = scmp.eq.s32.totalorder %s25, 1
      %p88 = por %p86, %p87
      %p90 = scmp.ne.s32.totalorder %s73, %s89
      %p91 = scmp.eq.s32.totalorder %s25, 0
      %p92 = por %p90, %p91
      %s94 = sadd.s32 %s93, 1
      %p97 = scmp.eq.s32.totalorder %s19, 1
      %p98 = scmp.ne.s32.totalorder %s93, %s95
      %p99 = scmp.eq.s32.totalorder %s19, 0
      %p100 = por %p98, %p99
      %p101 = scmp.ne.s32.totalorder %s93, %s95
      %p102 = scmp.eq.s32.totalorder %s24, 1
      %p103 = por %p101, %p102
      %p104 = scmp.ne.s32.totalorder %s95, %s96
      %p105 = scmp.eq.s32.totalorder %s24, 0
      %p106 = por %p104, %p105
      %p107 = scmp.ne.s32.totalorder %s95, %s96
      %p108 = scmp.eq.s32.totalorder %s25, 1
      %p109 = por %p107, %p108
      %p111 = scmp.ne.s32.totalorder %s96, %s110
      %p112 = scmp.eq.s32.totalorder %s25, 0
      %p113 = por %p111, %p112
      %s115 = sadd.s32 %s114, 1
      %p118 = scmp.eq.s32.totalorder %s19, 1
      %p119 = scmp.ne.s32.totalorder %s114, %s116
      %p120 = scmp.eq.s32.totalorder %s19, 0
      %p121 = por %p119, %p120
      %p122 = scmp.ne.s32.totalorder %s114, %s116
      %p123 = scmp.eq.s32.totalorder %s24, 1
      %p124 = por %p122, %p123
      %p125 = scmp.ne.s32.totalorder %s116, %s117
      %p126 = scmp.eq.s32.totalorder %s24, 0
      %p127 = por %p125, %p126
      %p128 = scmp.ne.s32.totalorder %s116, %s117
      %p129 = scmp.eq.s32.totalorder %s25, 1
      %p130 = por %p128, %p129
      %p132 = scmp.ne.s32.totalorder %s117, %s131
      %p133 = scmp.eq.s32.totalorder %s25, 0
      %p134 = por %p132, %p133
      %s136 = sadd.s32 %s135, 1
      %p139 = scmp.eq.s32.totalorder %s19, 1
      %p140 = scmp.ne.s32.totalorder %s135, %s137
      %p141 = scmp.eq.s32.totalorder %s19, 0
      %p142 = por %p140, %p141
      %p143 = scmp.ne.s32.totalorder %s135, %s137
      %p144 = scmp.eq.s32.totalorder %s24, 1
      %p145 = por %p143, %p144
      %p146 = scmp.ne.s32.totalorder %s137, %s138
      %p147 = scmp.eq.s32.totalorder %s24, 0
      %p148 = por %p146, %p147
      %p149 = scmp.ne.s32.totalorder %s137, %s138
      %p150 = scmp.eq.s32.totalorder %s25, 1
      %p151 = por %p149, %p150
      %p153 = scmp.ne.s32.totalorder %s138, %s152
      %p154 = scmp.eq.s32.totalorder %s25, 0
      %p155 = por %p153, %p154
      %s156 = ssub.s32 %s26, %s38
      %p157 = scmp.eq.s32.totalorder %s156, 0
      %s159 = sadd.s32 %s158, 1
      %s160 = scalar_select %p157, %s158, %s159
      %p163 = pneg %p157
      %p164 = scmp.eq.s32.totalorder %s19, 1
      %p165 = por %p163, %p164
      %p166 = scmp.ne.s32.totalorder %s158, %s161
      %p167 = scmp.eq.s32.totalorder %s19, 0
      %p168 = por %p166, %p167
      %p169 = scmp.ne.s32.totalorder %s158, %s161
      %p170 = scmp.eq.s32.totalorder %s24, 1
      %p171 = por %p169, %p170
      %p172 = scmp.ne.s32.totalorder %s161, %s162
      %p173 = scmp.eq.s32.totalorder %s24, 0
      %p174 = por %p172, %p173
      %p175 = scmp.ne.s32.totalorder %s161, %s162
      %p176 = scmp.eq.s32.totalorder %s25, 1
      %p177 = por %p175, %p176
      %p179 = scmp.ne.s32.totalorder %s162, %s178
      %p180 = scmp.eq.s32.totalorder %s25, 0
      %p181 = por %p179, %p180
      %p182 = scmp.le.s32.totalorder 1, %s19
      %p183 = scmp.lt.s32.totalorder %s19, 3
      %p184 = pnand %p182, %p183
      %p185 = pneg %p184
      // Predicated region
      $region9: #{triplet_net_forward.1} parent=5 // pred_check
        _
      $region10: #{triplet_net_forward.1} parent=5 // pred_check_branch
        %187 = sbr.rel (%p184) target = $region12
      $region11: #{triplet_net_forward.1} parent=5 // pred_region
        %s188 = ssub.s32 %s19, 1
        // Predicated region
        $region13: #{triplet_net_forward.1} parent=11 // pred_check
          %p189 = pneg %p106
        $region14: #{triplet_net_forward.1} parent=11 // pred_check_branch
          %191 = sbr.rel (%p189) target = $region16
        $region15: #{triplet_net_forward.1} parent=11 // pred_region
          %s193 = ssub.s32 16, 16
          %194 = vsyncadd [#allocation7], %s193
          %s196 = sshll.u32 [#allocation8], 4
          %s197 = int_to_ptr.vmem [resolvable:$true] %s196
          %199 = dma.hbm_to_vmem [thread:$0]  %s2, 16, %s197, [#allocation7]
        $region16: #{triplet_net_forward.1} parent=11 // pred_fallthru
          _
        // Predicated region
        $region17: #{triplet_net_forward.1} parent=11 // pred_check
          %p200 = pneg %p127
        $region18: #{triplet_net_forward.1} parent=11 // pred_check_branch
          %202 = sbr.rel (%p200) target = $region20
        $region19: #{triplet_net_forward.1} parent=11 // pred_region
          %s204 = ssub.s32 1024, 1024
          %205 = vsyncadd [#allocation10], %s204
          %s206 = sshll.u32 [#allocation9], 4
          %s207 = int_to_ptr.vmem [resolvable:$true] %s206
          %212 = dma.hbm_to_vmem [thread:$0]  %s3, 1024, %s207, [#allocation10], 64, 64, 4
        $region20: #{triplet_net_forward.1} parent=11 // pred_fallthru
          _
        // Predicated region
        $region21: #{triplet_net_forward.1} parent=11 // pred_check
          %p213 = pneg %p148
        $region22: #{triplet_net_forward.1} parent=11 // pred_check_branch
          %215 = sbr.rel (%p213) target = $region24
        $region23: #{triplet_net_forward.1} parent=11 // pred_region
          %s217 = ssub.s32 16, 16
          %218 = vsyncadd [#allocation10], %s217
          %s220 = sshll.u32 [#allocation11], 4
          %s221 = int_to_ptr.vmem [resolvable:$true] %s220
          %223 = dma.hbm_to_vmem [thread:$0]  %s4, 16, %s221, [#allocation10]
        $region24: #{triplet_net_forward.1} parent=11 // pred_fallthru
          _
      $region12: #{triplet_net_forward.1} parent=5 // pred_fallthru
        _
      %p224 = scmp.lt.s32.totalorder %s19, 2
      // Predicated region
      $region25: #{triplet_net_forward.1} parent=5 // pred_check
        %p225 = pneg %p224
      $region26: #{triplet_net_forward.1} parent=5 // pred_check_branch
        %227 = sbr.rel (%p225) target = $region28
      $region27: #{triplet_net_forward.1} parent=5 // pred_region
        // Predicated region
        $region29: #{triplet_net_forward.1} parent=27 // pred_check
          %p228 = pneg %p53
        $region30: #{triplet_net_forward.1} parent=27 // pred_check_branch
          %230 = sbr.rel (%p228) target = $region32
        $region31: #{triplet_net_forward.1} parent=27 // pred_region
          %s231 = sand.u32 %s43, 1
          %s232 = scalar_lea.sflag [#allocation4], %s231
          %s233 = sand.u32 %s43, 1
          %s234 = smul.addr %s233, 16
          %s235 = scalar_lea.vmem [#allocation3], %s234
          %s236 = smul.u32 4, %s27
          %s238 = ssub.s32 256, 256
          %239 = vsyncadd %s232, %s238
          %s240 = smul.addr %s26, 8
          %s241 = sadd.s32 %s236, %s240
          %s242 = smul.addr %s241, 64
          %s243 = scalar_lea.hbm %s0, %s242
          %s245 = sshll.u32 %s235, 4
          %s246 = int_to_ptr.vmem [resolvable:$true] %s245
          %248 = dma.hbm_to_vmem [thread:$0]  %s243, 256, %s246, %s232
        $region32: #{triplet_net_forward.1} parent=27 // pred_fallthru
          _
        // Predicated region
        $region33: #{triplet_net_forward.1} parent=27 // pred_check
          %p249 = pneg %p79
        $region34: #{triplet_net_forward.1} parent=27 // pred_check_branch
          %251 = sbr.rel (%p249) target = $region36
        $region35: #{triplet_net_forward.1} parent=27 // pred_region
          %s252 = sand.u32 %s19, 1
          %s253 = scalar_lea.sflag [#allocation7], %s252
          %s254 = sand.u32 %s69, 1
          %s255 = smul.addr %s254, 256
          %s256 = scalar_lea.vmem [#allocation6], %s255
          %s257 = smul.u32 64, %s27
          %s259 = ssub.s32 4096, 4096
          %260 = vsyncadd %s253, %s259
          %s261 = smul.addr %s257, 64
          %s262 = scalar_lea.hbm %s1, %s261
          %s263 = sshll.u32 %s256, 4
          %s264 = int_to_ptr.vmem [resolvable:$true] %s263
          %269 = dma.hbm_to_vmem [thread:$0]  %s262, 4096, %s264, %s253, 64, 64, 4
        $region36: #{triplet_net_forward.1} parent=27 // pred_fallthru
          _
      $region28: #{triplet_net_forward.1} parent=5 // pred_fallthru
        _
      %p270 = scmp.le.s32.totalorder 1, %s19
      %p271 = scmp.lt.s32.totalorder %s19, 3
      %p272 = pnand %p270, %p271
      %p273 = pneg %p272
      // Predicated region
      $region37: #{triplet_net_forward.1} parent=5 // pred_check
        _
      $region38: #{triplet_net_forward.1} parent=5 // pred_check_branch
        %275 = sbr.rel (%p272) target = $region40
      $region39: #{triplet_net_forward.1} parent=5 // pred_region
        %s276 = ssub.s32 %s19, 1
        %s277 = sand.u32 %s46, 1
        %s278 = scalar_lea.sflag [#allocation4], %s277
        %s279 = sand.u32 %s46, 1
        %s280 = smul.addr %s279, 16
        %s281 = scalar_lea.vmem [#allocation3], %s280
        // Predicated region
        $region41: #{triplet_net_forward.1} parent=39 // pred_check
          %p282 = pneg %p59
        $region42: #{triplet_net_forward.1} parent=39 // pred_check_branch
          %284 = sbr.rel (%p282) target = $region44
        $region43: #{triplet_net_forward.1} parent=39 // pred_region
          %285 = dma.done %s278, 256
        $region44: #{triplet_net_forward.1} parent=39 // pred_fallthru
          _
        %s286 = sand.u32 %s24, 1
        %s287 = scalar_lea.sflag [#allocation7], %s286
        %s288 = sand.u32 %s72, 1
        %s289 = smul.addr %s288, 256
        %s290 = scalar_lea.vmem [#allocation6], %s289
        // Predicated region
        $region45: #{triplet_net_forward.1} parent=39 // pred_check
          %p291 = pneg %p85
        $region46: #{triplet_net_forward.1} parent=39 // pred_check_branch
          %293 = sbr.rel (%p291) target = $region48
        $region47: #{triplet_net_forward.1} parent=39 // pred_region
          %294 = dma.done %s287, 4096
        $region48: #{triplet_net_forward.1} parent=39 // pred_fallthru
          _
        // Predicated region
        $region49: #{triplet_net_forward.1} parent=39 // pred_check
          %p295 = pneg %p106
        $region50: #{triplet_net_forward.1} parent=39 // pred_check_branch
          %297 = sbr.rel (%p295) target = $region52
        $region51: #{triplet_net_forward.1} parent=39 // pred_region
          %298 = dma.done [#allocation7], 16
        $region52: #{triplet_net_forward.1} parent=39 // pred_fallthru
          _
        // Predicated region
        $region53: #{triplet_net_forward.1} parent=39 // pred_check
          %p299 = pneg %p127
        $region54: #{triplet_net_forward.1} parent=39 // pred_check_branch
          %301 = sbr.rel (%p299) target = $region56
        $region55: #{triplet_net_forward.1} parent=39 // pred_region
          %302 = dma.done [#allocation10], 1024
        $region56: #{triplet_net_forward.1} parent=39 // pred_fallthru
          _
        // Predicated region
        $region57: #{triplet_net_forward.1} parent=39 // pred_check
          %p303 = pneg %p148
        $region58: #{triplet_net_forward.1} parent=39 // pred_check_branch
          %305 = sbr.rel (%p303) target = $region60
        $region59: #{triplet_net_forward.1} parent=39 // pred_region
          %306 = dma.done [#allocation10], 16
        $region60: #{triplet_net_forward.1} parent=39 // pred_fallthru
          _
        %s307 = sand.u32 %s46, 1
        %s308 = scalar_lea.sflag [#allocation4], %s307
        %s309 = sand.u32 %s46, 1
        %s310 = smul.addr %s309, 16
        %s311 = scalar_lea.vmem [#allocation3], %s310
        %p312 = pneg %p59
        %p313 = pneg %p56
        %s314 = sand.u32 %s24, 1
        %s315 = scalar_lea.sflag [#allocation7], %s314
        %s316 = sand.u32 %s72, 1
        %s317 = smul.addr %s316, 256
        %s318 = scalar_lea.vmem [#allocation6], %s317
        %p319 = pneg %p85
        %p320 = pneg %p82
        %p321 = pneg %p106
        %p322 = pneg %p103
        %p323 = pneg %p127
        %p324 = pneg %p124
        %p325 = pneg %p148
        %p326 = pneg %p145
        %p327 = pneg %p174
        %p328 = pneg %p171
        %s329 = smul.u32 4, %s29
        %s330 = smul.u32 64, %s29
        %p332 = scmp.eq.s32.totalorder %s29, 0
        // Predicated region
        $region61: #{triplet_net_forward.1} parent=39 // pred_check
          %p333 = pneg %p332
        $region62: #{triplet_net_forward.1} parent=39 // pred_check_branch
          %335 = sbr.rel (%p333) target = $region64
        $region63: #{triplet_net_forward.1} parent=39 // pred_region
          %336 = vst [vmem:[#allocation2] sm:$0xff] 0.0
        $region64: #{triplet_net_forward.1} parent=39 // pred_fallthru
          _
        %v337 = vld [vmem:[#allocation2] sm:$0xff]
        %v338 = vld [vmem:[%s281] sm:$0xff]
        %v339 = vld [vmem:[%s281 + $0x8] sm:$0xff]
        %v340 = vld [vmem:[%s290] sm:$0xf]
        %v341 = vld [vmem:[%s290 + $0x4] sm:$0xf]
        %v342 = vld [vmem:[%s290 + $0x8] sm:$0xf]
        %v343 = vld [vmem:[%s290 + $0xc] sm:$0xf]
        %v344 = vld [vmem:[%s290 + $0x10] sm:$0xf]
        %v345 = vld [vmem:[%s290 + $0x14] sm:$0xf]
        %v346 = vld [vmem:[%s290 + $0x18] sm:$0xf]
        %v347 = vld [vmem:[%s290 + $0x1c] sm:$0xf]
        %v348 = vld [vmem:[%s290 + $0x20] sm:$0xf]
        %v349 = vld [vmem:[%s290 + $0x24] sm:$0xf]
        %v350 = vld [vmem:[%s290 + $0x28] sm:$0xf]
        %v351 = vld [vmem:[%s290 + $0x2c] sm:$0xf]
        %v352 = vld [vmem:[%s290 + $0x30] sm:$0xf]
        %v353 = vld [vmem:[%s290 + $0x34] sm:$0xf]
        %v354 = vld [vmem:[%s290 + $0x38] sm:$0xf]
        %v355 = vld [vmem:[%s290 + $0x3c] sm:$0xf]
        %v356 = vld [vmem:[%s290 + $0x40] sm:$0xf]
        %v357 = vld [vmem:[%s290 + $0x44] sm:$0xf]
        %v358 = vld [vmem:[%s290 + $0x48] sm:$0xf]
        %v359 = vld [vmem:[%s290 + $0x4c] sm:$0xf]
        %v360 = vld [vmem:[%s290 + $0x50] sm:$0xf]
        %v361 = vld [vmem:[%s290 + $0x54] sm:$0xf]
        %v362 = vld [vmem:[%s290 + $0x58] sm:$0xf]
        %v363 = vld [vmem:[%s290 + $0x5c] sm:$0xf]
        %v364 = vld [vmem:[%s290 + $0x60] sm:$0xf]
        %v365 = vld [vmem:[%s290 + $0x64] sm:$0xf]
        %v366 = vld [vmem:[%s290 + $0x68] sm:$0xf]
        %v367 = vld [vmem:[%s290 + $0x6c] sm:$0xf]
        %v368 = vld [vmem:[%s290 + $0x70] sm:$0xf]
        %v369 = vld [vmem:[%s290 + $0x74] sm:$0xf]
        %v370 = vld [vmem:[%s290 + $0x78] sm:$0xf]
        %v371 = vld [vmem:[%s290 + $0x7c] sm:$0xf]
        %v372 = vld [vmem:[%s290 + $0x80] sm:$0xf]
        %v373 = vld [vmem:[%s290 + $0x84] sm:$0xf]
        %v374 = vld [vmem:[%s290 + $0x88] sm:$0xf]
        %v375 = vld [vmem:[%s290 + $0x8c] sm:$0xf]
        %v376 = vld [vmem:[%s290 + $0x90] sm:$0xf]
        %v377 = vld [vmem:[%s290 + $0x94] sm:$0xf]
        %v378 = vld [vmem:[%s290 + $0x98] sm:$0xf]
        %v379 = vld [vmem:[%s290 + $0x9c] sm:$0xf]
        %v380 = vld [vmem:[%s290 + $0xa0] sm:$0xf]
        %v381 = vld [vmem:[%s290 + $0xa4] sm:$0xf]
        %v382 = vld [vmem:[%s290 + $0xa8] sm:$0xf]
        %v383 = vld [vmem:[%s290 + $0xac] sm:$0xf]
        %v384 = vld [vmem:[%s290 + $0xb0] sm:$0xf]
        %v385 = vld [vmem:[%s290 + $0xb4] sm:$0xf]
        %v386 = vld [vmem:[%s290 + $0xb8] sm:$0xf]
        %v387 = vld [vmem:[%s290 + $0xbc] sm:$0xf]
        %v388 = vld [vmem:[%s290 + $0xc0] sm:$0xf]
        %v389 = vld [vmem:[%s290 + $0xc4] sm:$0xf]
        %v390 = vld [vmem:[%s290 + $0xc8] sm:$0xf]
        %v391 = vld [vmem:[%s290 + $0xcc] sm:$0xf]
        %v392 = vld [vmem:[%s290 + $0xd0] sm:$0xf]
        %v393 = vld [vmem:[%s290 + $0xd4] sm:$0xf]
        %v394 = vld [vmem:[%s290 + $0xd8] sm:$0xf]
        %v395 = vld [vmem:[%s290 + $0xdc] sm:$0xf]
        %v396 = vld [vmem:[%s290 + $0xe0] sm:$0xf]
        %v397 = vld [vmem:[%s290 + $0xe4] sm:$0xf]
        %v398 = vld [vmem:[%s290 + $0xe8] sm:$0xf]
        %v399 = vld [vmem:[%s290 + $0xec] sm:$0xf]
        %v400 = vld [vmem:[%s290 + $0xf0] sm:$0xf]
        %v401 = vld [vmem:[%s290 + $0xf4] sm:$0xf]
        %v402 = vld [vmem:[%s290 + $0xf8] sm:$0xf]
        %v403 = vld [vmem:[%s290 + $0xfc] sm:$0xf]
        %v406 = vunpack.c.l.b16 %v338
        %v407 = vunpack.c.h.b16 %v338
        %v408 = vunpack.c.l.b16 %v339
        %v409 = vunpack.c.h.b16 %v339
        %v410 = vpack.c.b16 %v406, %v406
        %v411 = vpack.c.b16 %v407, %v407
        %v412 = vpack.c.b16 %v408, %v408
        %v413 = vpack.c.b16 %v409, %v409
        %v482 = vunpack.c.l.b16 %v340
        %v483 = vunpack.c.l.b16 %v341
        %v484 = vunpack.c.l.b16 %v342
        %v485 = vunpack.c.l.b16 %v343
        %v486 = vunpack.c.l.b16 %v344
        %v487 = vunpack.c.l.b16 %v345
        %v488 = vunpack.c.l.b16 %v346
        %v489 = vunpack.c.l.b16 %v347
        %v490 = vunpack.c.l.b16 %v348
        %v491 = vunpack.c.l.b16 %v349
        %v492 = vunpack.c.l.b16 %v350
        %v493 = vunpack.c.l.b16 %v351
        %v494 = vunpack.c.l.b16 %v352
        %v495 = vunpack.c.l.b16 %v353
        %v496 = vunpack.c.l.b16 %v354
        %v497 = vunpack.c.l.b16 %v355
        %v498 = vunpack.c.l.b16 %v356
        %v499 = vunpack.c.l.b16 %v357
        %v500 = vunpack.c.l.b16 %v358
        %v501 = vunpack.c.l.b16 %v359
        %v502 = vunpack.c.l.b16 %v360
        %v503 = vunpack.c.l.b16 %v361
        %v504 = vunpack.c.l.b16 %v362
        %v505 = vunpack.c.l.b16 %v363
        %v506 = vunpack.c.l.b16 %v364
        %v507 = vunpack.c.l.b16 %v365
        %v508 = vunpack.c.l.b16 %v366
        %v509 = vunpack.c.l.b16 %v367
        %v510 = vunpack.c.l.b16 %v368
        %v511 = vunpack.c.l.b16 %v369
        %v512 = vunpack.c.l.b16 %v370
        %v513 = vunpack.c.l.b16 %v371
        %v514 = vunpack.c.l.b16 %v372
        %v515 = vunpack.c.l.b16 %v373
        %v516 = vunpack.c.l.b16 %v374
        %v517 = vunpack.c.l.b16 %v375
        %v518 = vunpack.c.l.b16 %v376
        %v519 = vunpack.c.l.b16 %v377
        %v520 = vunpack.c.l.b16 %v378
        %v521 = vunpack.c.l.b16 %v379
        %v522 = vunpack.c.l.b16 %v380
        %v523 = vunpack.c.l.b16 %v381
        %v524 = vunpack.c.l.b16 %v382
        %v525 = vunpack.c.l.b16 %v383
        %v526 = vunpack.c.l.b16 %v384
        %v527 = vunpack.c.l.b16 %v385
        %v528 = vunpack.c.l.b16 %v386
        %v529 = vunpack.c.l.b16 %v387
        %v530 = vunpack.c.l.b16 %v388
        %v531 = vunpack.c.l.b16 %v389
        %v532 = vunpack.c.l.b16 %v390
        %v533 = vunpack.c.l.b16 %v391
        %v534 = vunpack.c.l.b16 %v392
        %v535 = vunpack.c.l.b16 %v393
        %v536 = vunpack.c.l.b16 %v394
        %v537 = vunpack.c.l.b16 %v395
        %v538 = vunpack.c.l.b16 %v396
        %v539 = vunpack.c.l.b16 %v397
        %v540 = vunpack.c.l.b16 %v398
        %v541 = vunpack.c.l.b16 %v399
        %v542 = vunpack.c.l.b16 %v400
        %v543 = vunpack.c.l.b16 %v401
        %v544 = vunpack.c.l.b16 %v402
        %v545 = vunpack.c.l.b16 %v403
        %v546 = vpack.c.b16 %v483, %v482
        %v547 = vpack.c.b16 %v485, %v484
        %v548 = vpack.c.b16 %v487, %v486
        %v549 = vpack.c.b16 %v489, %v488
        %v550 = vpack.c.b16 %v491, %v490
        %v551 = vpack.c.b16 %v493, %v492
        %v552 = vpack.c.b16 %v495, %v494
        %v553 = vpack.c.b16 %v497, %v496
        %v554 = vpack.c.b16 %v499, %v498
        %v555 = vpack.c.b16 %v501, %v500
        %v556 = vpack.c.b16 %v503, %v502
        %v557 = vpack.c.b16 %v505, %v504
        %v558 = vpack.c.b16 %v507, %v506
        %v559 = vpack.c.b16 %v509, %v508
        %v560 = vpack.c.b16 %v511, %v510
        %v561 = vpack.c.b16 %v513, %v512
        %v562 = vpack.c.b16 %v515, %v514
        %v563 = vpack.c.b16 %v517, %v516
        %v564 = vpack.c.b16 %v519, %v518
        %v565 = vpack.c.b16 %v521, %v520
        %v566 = vpack.c.b16 %v523, %v522
        %v567 = vpack.c.b16 %v525, %v524
        %v568 = vpack.c.b16 %v527, %v526
        %v569 = vpack.c.b16 %v529, %v528
        %v570 = vpack.c.b16 %v531, %v530
        %v571 = vpack.c.b16 %v533, %v532
        %v572 = vpack.c.b16 %v535, %v534
        %v573 = vpack.c.b16 %v537, %v536
        %v574 = vpack.c.b16 %v539, %v538
        %v575 = vpack.c.b16 %v541, %v540
        %v576 = vpack.c.b16 %v543, %v542
        %v577 = vpack.c.b16 %v545, %v544
        %610 = vmatprep.subr.bf16.mxu0 0
        %611 = vmatpush1.bf16.msra.mxu0 %v546
        %612 = vmatprep.subr.bf16.mxu0 0
        %613 = vmatpush1.bf16.msra.mxu0 %v547
        %614 = vmatprep.subr.bf16.mxu0 0
        %615 = vmatpush1.bf16.msra.mxu0 %v548
        %616 = vmatprep.subr.bf16.mxu0 0
        %617 = vmatpush1.bf16.msra.mxu0 %v549
        %618 = vmatprep.subr.bf16.mxu0 0
        %619 = vmatpush1.bf16.msra.mxu0 %v550
        %620 = vmatprep.subr.bf16.mxu0 0
        %621 = vmatpush1.bf16.msra.mxu0 %v551
        %622 = vmatprep.subr.bf16.mxu0 0
        %623 = vmatpush1.bf16.msra.mxu0 %v552
        %624 = vmatprep.subr.bf16.mxu0 0
        %625 = vmatpush1.bf16.msra.mxu0 %v553
        %626 = vmatprep.subr.bf16.mxu0 0
        %627 = vmatpush1.bf16.msra.mxu0 %v554
        %628 = vmatprep.subr.bf16.mxu0 0
        %629 = vmatpush1.bf16.msra.mxu0 %v555
        %630 = vmatprep.subr.bf16.mxu0 0
        %631 = vmatpush1.bf16.msra.mxu0 %v556
        %632 = vmatprep.subr.bf16.mxu0 0
        %633 = vmatpush1.bf16.msra.mxu0 %v557
        %634 = vmatprep.subr.bf16.mxu0 0
        %635 = vmatpush1.bf16.msra.mxu0 %v558
        %636 = vmatprep.subr.bf16.mxu0 0
        %637 = vmatpush1.bf16.msra.mxu0 %v559
        %638 = vmatprep.subr.bf16.mxu0 0
        %639 = vmatpush1.bf16.msra.mxu0 %v560
        %640 = vmatprep.subr.bf16.mxu0 0
        %641 = vmatpush1.bf16.msra.mxu0 %v561
        %642 = vmatprep.mubr.bf16.mxu0 %v411
        %643 = vmatmul.mubr.bf16.gmra.mrb[0].mxu0 %v410
        %v644 = vpop.f32.mrb[0].mxu0
        %v645 = vadd.f32 0.0, %v644
        %v646 = vpop.f32.mrb[0].mxu0
        %v647 = vpop.f32.mrb[0].mxu0
        %v648 = vpop.f32.mrb[0].mxu0
        %649 = vdwg.mxu0
        %650 = vmatprep.subr.bf16.mxu0 0
        %651 = vmatpush1.bf16.msra.mxu0 %v562
        %652 = vmatprep.subr.bf16.mxu0 0
        %653 = vmatpush1.bf16.msra.mxu0 %v563
        %654 = vmatprep.subr.bf16.mxu0 0
        %655 = vmatpush1.bf16.msra.mxu0 %v564
        %656 = vmatprep.subr.bf16.mxu0 0
        %657 = vmatpush1.bf16.msra.mxu0 %v565
        %658 = vmatprep.subr.bf16.mxu0 0
        %659 = vmatpush1.bf16.msra.mxu0 %v566
        %660 = vmatprep.subr.bf16.mxu0 0
        %661 = vmatpush1.bf16.msra.mxu0 %v567
        %662 = vmatprep.subr.bf16.mxu0 0
        %663 = vmatpush1.bf16.msra.mxu0 %v568
        %664 = vmatprep.subr.bf16.mxu0 0
        %665 = vmatpush1.bf16.msra.mxu0 %v569
        %666 = vmatprep.subr.bf16.mxu0 0
        %667 = vmatpush1.bf16.msra.mxu0 %v570
        %668 = vmatprep.subr.bf16.mxu0 0
        %669 = vmatpush1.bf16.msra.mxu0 %v571
        %670 = vmatprep.subr.bf16.mxu0 0
        %671 = vmatpush1.bf16.msra.mxu0 %v572
        %672 = vmatprep.subr.bf16.mxu0 0
        %673 = vmatpush1.bf16.msra.mxu0 %v573
        %674 = vmatprep.subr.bf16.mxu0 0
        %675 = vmatpush1.bf16.msra.mxu0 %v574
        %676 = vmatprep.subr.bf16.mxu0 0
        %677 = vmatpush1.bf16.msra.mxu0 %v575
        %678 = vmatprep.subr.bf16.mxu0 0
        %679 = vmatpush1.bf16.msra.mxu0 %v576
        %680 = vmatprep.subr.bf16.mxu0 0
        %681 = vmatpush1.bf16.msra.mxu0 %v577
        %682 = vmatprep.mubr.bf16.mxu0 %v413
        %683 = vmatmul.mubr.bf16.gmra.mrb[0].mxu0 %v412
        %v684 = vpop.f32.mrb[0].mxu0
        %v685 = vadd.f32 %v645, %v684
        %v686 = vpop.f32.mrb[0].mxu0
        %v687 = vpop.f32.mrb[0].mxu0
        %v688 = vpop.f32.mrb[0].mxu0
        %689 = vdwg.mxu0
        %v690 = vadd.f32 %v337, %v685
        %691 = vst [vmem:[#allocation2] sm:$0xff] %v690
        %p692 = scmp.eq.s32.totalorder %s29, 1
        // Predicated region
        $region65: #{triplet_net_forward.1} parent=39 // pred_check
          %p693 = pneg %p692
        $region66: #{triplet_net_forward.1} parent=39 // pred_check_branch
          %695 = sbr.rel (%p693) target = $region68
        $region67: #{triplet_net_forward.1} parent=39 // pred_region
          %v696 = vld [vmem:[#allocation2] sm:$0xff]
          %v697 = vld [vmem:[#allocation8] sm:$0x1]
          %v699 = vlaneseq
          %v700 = vshrl.u32 %v699, 7
          %v701 = vsub.s32 0, %v700
          %v702 = vrot.slane %v697, %v701
          %v704 = vadd.f32 %v696, %v702
          %v705 = vmax.f32 %v704, 0.0
          %v706 = vpack.c.bf16 %v705, %v705
          %v707 = vld [vmem:[#allocation9] sm:$0xf]
          %v708 = vld [vmem:[#allocation9 + $0x4] sm:$0xf]
          %v709 = vld [vmem:[#allocation9 + $0x8] sm:$0xf]
          %v710 = vld [vmem:[#allocation9 + $0xc] sm:$0xf]
          %v711 = vld [vmem:[#allocation9 + $0x10] sm:$0xf]
          %v712 = vld [vmem:[#allocation9 + $0x14] sm:$0xf]
          %v713 = vld [vmem:[#allocation9 + $0x18] sm:$0xf]
          %v714 = vld [vmem:[#allocation9 + $0x1c] sm:$0xf]
          %v715 = vld [vmem:[#allocation9 + $0x20] sm:$0xf]
          %v716 = vld [vmem:[#allocation9 + $0x24] sm:$0xf]
          %v717 = vld [vmem:[#allocation9 + $0x28] sm:$0xf]
          %v718 = vld [vmem:[#allocation9 + $0x2c] sm:$0xf]
          %v719 = vld [vmem:[#allocation9 + $0x30] sm:$0xf]
          %v720 = vld [vmem:[#allocation9 + $0x34] sm:$0xf]
          %v721 = vld [vmem:[#allocation9 + $0x38] sm:$0xf]
          %v722 = vld [vmem:[#allocation9 + $0x3c] sm:$0xf]
          %v723 = vld [vmem:[#allocation11] sm:$0x1]
          %v725 = vlaneseq
          %v726 = vshrl.u32 %v725, 7
          %v727 = vsub.s32 0, %v726
          %v728 = vrot.slane %v723, %v727
          %v746 = vunpack.c.l.b16 %v707
          %v747 = vunpack.c.l.b16 %v708
          %v748 = vunpack.c.l.b16 %v709
          %v749 = vunpack.c.l.b16 %v710
          %v750 = vunpack.c.l.b16 %v711
          %v751 = vunpack.c.l.b16 %v712
          %v752 = vunpack.c.l.b16 %v713
          %v753 = vunpack.c.l.b16 %v714
          %v754 = vunpack.c.l.b16 %v715
          %v755 = vunpack.c.l.b16 %v716
          %v756 = vunpack.c.l.b16 %v717
          %v757 = vunpack.c.l.b16 %v718
          %v758 = vunpack.c.l.b16 %v719
          %v759 = vunpack.c.l.b16 %v720
          %v760 = vunpack.c.l.b16 %v721
          %v761 = vunpack.c.l.b16 %v722
          %v762 = vpack.c.b16 %v747, %v746
          %v763 = vpack.c.b16 %v749, %v748
          %v764 = vpack.c.b16 %v751, %v750
          %v765 = vpack.c.b16 %v753, %v752
          %v766 = vpack.c.b16 %v755, %v754
          %v767 = vpack.c.b16 %v757, %v756
          %v768 = vpack.c.b16 %v759, %v758
          %v769 = vpack.c.b16 %v761, %v760
          %778 = vmatprep.subr.bf16.mxu0 0
          %779 = vmatpush1.bf16.msra.mxu0 %v762
          %780 = vmatprep.subr.bf16.mxu0 0
          %781 = vmatpush1.bf16.msra.mxu0 %v763
          %782 = vmatprep.subr.bf16.mxu0 0
          %783 = vmatpush1.bf16.msra.mxu0 %v764
          %784 = vmatprep.subr.bf16.mxu0 0
          %785 = vmatpush1.bf16.msra.mxu0 %v765
          %786 = vmatprep.subr.bf16.mxu0 0
          %787 = vmatpush1.bf16.msra.mxu0 %v766
          %788 = vmatprep.subr.bf16.mxu0 0
          %789 = vmatpush1.bf16.msra.mxu0 %v767
          %790 = vmatprep.subr.bf16.mxu0 0
          %791 = vmatpush1.bf16.msra.mxu0 %v768
          %792 = vmatprep.subr.bf16.mxu0 0
          %793 = vmatpush1.bf16.msra.mxu0 %v769
          %794 = vmatprep.subr.bf16.mxu0 0
          %795 = vmatpush1.bf16.msra.mxu0 0
          %796 = vmatprep.subr.bf16.mxu0 0
          %797 = vmatpush1.bf16.msra.mxu0 0
          %798 = vmatprep.subr.bf16.mxu0 0
          %799 = vmatpush1.bf16.msra.mxu0 0
          %800 = vmatprep.subr.bf16.mxu0 0
          %801 = vmatpush1.bf16.msra.mxu0 0
          %802 = vmatprep.subr.bf16.mxu0 0
          %803 = vmatpush1.bf16.msra.mxu0 0
          %804 = vmatprep.subr.bf16.mxu0 0
          %805 = vmatpush1.bf16.msra.mxu0 0
          %806 = vmatprep.subr.bf16.mxu0 0
          %807 = vmatpush1.bf16.msra.mxu0 0
          %808 = vmatprep.subr.bf16.mxu0 0
          %809 = vmatpush1.bf16.msra.mxu0 0
          %810 = vmatprep.mubr.bf16.mxu0 0
          %811 = vmatmul.mubr.bf16.gmra.mrb[0].mxu0 %v706
          %v812 = vpop.f32.mrb[0].mxu0
          %v813 = vadd.f32 %v728, %v812
          %v814 = vpop.f32.mrb[0].mxu0
          %v815 = vpop.f32.mrb[0].mxu0
          %v816 = vpop.f32.mrb[0].mxu0
          %817 = vdwg.mxu0
          %818 = vst [vmem:[#allocation12] sm:$0xff] %v813
        $region68: #{triplet_net_forward.1} parent=39 // pred_fallthru
          _
        // Predicated region
        $region69: #{triplet_net_forward.1} parent=39 // pred_check
          %p819 = pneg %p171
        $region70: #{triplet_net_forward.1} parent=39 // pred_check_branch
          %821 = sbr.rel (%p819) target = $region72
        $region71: #{triplet_net_forward.1} parent=39 // pred_region
          %s823 = ssub.s32 128, 128
          %824 = vsyncadd [#allocation5], %s823
          %s825 = smul.addr %s28, 128
          %s826 = scalar_lea.hbm %s5, %s825
          %s828 = sshll.u32 [#allocation12], 4
          %s829 = int_to_ptr.vmem [resolvable:$true] %s828
          %831 = dma.vmem_to_hbm [thread:$0]  %s829, 128, %s826, [#allocation5]
        $region72: #{triplet_net_forward.1} parent=39 // pred_fallthru
          _
        // Predicated region
        $region73: #{triplet_net_forward.1} parent=39 // pred_check
          %p832 = pneg %p171
        $region74: #{triplet_net_forward.1} parent=39 // pred_check_branch
          %834 = sbr.rel (%p832) target = $region76
        $region75: #{triplet_net_forward.1} parent=39 // pred_region
          %835 = dma.done [#allocation5], 128
        $region76: #{triplet_net_forward.1} parent=39 // pred_fallthru
          _
      $region40: #{triplet_net_forward.1} parent=5 // pred_fallthru
        _
      %p836 = scmp.le.s32.totalorder 2, %s19
      // Predicated region
      $region77: #{triplet_net_forward.1} parent=5 // pred_check
        %p837 = pneg %p836
      $region78: #{triplet_net_forward.1} parent=5 // pred_check_branch
        %839 = sbr.rel (%p837) target = $region80
      $region79: #{triplet_net_forward.1} parent=5 // pred_region
        %s840 = ssub.s32 %s19, 2
      $region80: #{triplet_net_forward.1} parent=5 // pred_fallthru
        _
    $region6: #{triplet_net_forward.1} parent=1 // loop_footer
      %s23 = sadd.s32 1, %s19
    $region7: #{triplet_net_forward.1} parent=1 // loop_footer_branch
      %18 = sbr.rel target = $region3
    $region8: #{triplet_net_forward.1} parent=1 // loop_exit
      _
    %841 = vsyncpa [#allocation4], 1
    %s842 = scalar_lea.sflag [#allocation4], 1
    %843 = vsyncpa %s842, 1
    %844 = vsyncpa [#allocation7], 1
    %s845 = scalar_lea.sflag [#allocation7], 1
    %846 = vsyncpa %s845, 1
    %847 = vsyncpa [#allocation10], 1
    %848 = vsyncpa [#allocation5], 1
    %s849 = scalar_lea.sflag [#allocation5], 1
    %850 = vsyncpa %s849, 1

</llo_original>
